<compile_context>
chip_gen: v7x
topology: tpu7x:2x2x1
jax: 0.10.0
libtpu: 0.0.40
codegen_flags: <defaults>
</compile_context>

<pallas_src>
import functools

import jax
import jax.numpy as jnp
from jax import lax
from jax.experimental import pallas as pl
from jax.experimental.pallas import tpu as pltpu


def _round_up(x, m):
    return ((x + m - 1) // m) * m


# -----------------------------------------------------------------------------
# linear MMD: single tiny fused kernel (overhead-bound regime; keep it simple)
# -----------------------------------------------------------------------------
def _linear_mmd_kernel(src_ref, tgt_ref, out_ref, *, inv_n, inv_m):
    src = src_ref[...].astype(jnp.float32)
    tgt = tgt_ref[...].astype(jnp.float32)
    delta = (jnp.sum(src, axis=0, keepdims=True) * inv_n
             - jnp.sum(tgt, axis=0, keepdims=True) * inv_m)          # (1, d)
    out_ref[...] = jnp.sum(delta * delta, keepdims=True)             # (1, 1)


def _linear_mmd(source, target):
    n = source.shape[0]
    m = target.shape[0]
    out = pl.pallas_call(
        functools.partial(_linear_mmd_kernel, inv_n=1.0 / n, inv_m=1.0 / m),
        out_shape=jax.ShapeDtypeStruct((1, 1), jnp.float32),
        in_specs=[pl.BlockSpec(memory_space=pltpu.MemorySpace.VMEM),
                  pl.BlockSpec(memory_space=pltpu.MemorySpace.VMEM)],
        out_specs=pl.BlockSpec(memory_space=pltpu.MemorySpace.VMEM),
    )(source, target)
    return out[0, 0]


# -----------------------------------------------------------------------------
# rbf MMD: tiled multi-bandwidth Gaussian kernel
# -----------------------------------------------------------------------------
def _rbf_tile_kernel(neg_ref, row_ref, col_ref, sqr_ref, sqc_ref, ur_ref, uc_ref,
                     out_ref, *, kernel_mul, kernel_num, matmul_dtype):
    j = pl.program_id(1)                         # trailing reduction (col-tile) axis

    @pl.when(j == 0)
    def _init():
        out_ref[...] = jnp.zeros_like(out_ref)

    # Gram block on the MXU (contract feature axis; no transposes needed).
    row = row_ref[...].astype(matmul_dtype)      # (tile, d)
    col = col_ref[...].astype(matmul_dtype)      # (tile, d)
    dims = (((1,), (1,)), ((), ()))
    gram = lax.dot_general(row, col, dims, preferred_element_type=jnp.float32)

    # Pairwise squared distances; clamp tiny negative cancellation residue.
    l2 = jnp.maximum(sqr_ref[...] + sqc_ref[...] - 2.0 * gram, 0.0)   # (tile, tile)

    # Sum of Gaussian kernels over kernel_num bandwidths.
    # neg_ref[i] = -1 / (bandwidth * kernel_mul**i)  (pre-folded sign+scale, SMEM).
    if kernel_mul == 2.0:
        # One exp at the widest bandwidth; derive the rest by repeated squaring
        # (E_{i-1} = E_i^2): EUP work cut kernel_num-fold, squares go to the VPU.
        e = jnp.exp(l2 * neg_ref[kernel_num - 1])
        acc = e
        for _ in range(kernel_num - 1):
            e = e * e
            acc = acc + e
    else:
        acc = jnp.exp(l2 * neg_ref[0])
        for i in range(1, kernel_num):
            acc = acc + jnp.exp(l2 * neg_ref[i])

    # Weighted block sum: sum_{a,b} u[a] * K[a,b] * u[b]
    col_weighted = jnp.sum(acc * uc_ref[...], axis=1, keepdims=True)  # (tile, 1)
    contrib = jnp.sum(col_weighted * ur_ref[...])                     # scalar
    out_ref[...] += contrib                                           # (1, 128) broadcast


def _rbf_mmd(source, target, kernel_mul, kernel_num, matmul_dtype):
    n, d = source.shape
    m, _ = target.shape
    big_n = n + m

    # ---- O(N*d) wrapper-side prep (XLA-fused; no O(N^2) work here) ----------
    src_f = source.astype(jnp.float32)
    tgt_f = target.astype(jnp.float32)
    sq_s = jnp.sum(src_f * src_f, axis=1)                    # (n,)
    sq_t = jnp.sum(tgt_f * tgt_f, axis=1)                    # (m,)

    # Closed-form bandwidth: sum_{i,j}||t_i-t_j||^2 = 2*N*sum||t_i||^2 - 2*||sum t_i||^2
    s2 = jnp.sum(sq_s) + jnp.sum(sq_t)
    s1 = jnp.sum(src_f, axis=0) + jnp.sum(tgt_f, axis=0)
    l2_sum = 2.0 * big_n * s2 - 2.0 * jnp.dot(s1, s1)
    bandwidth = l2_sum / float(big_n * big_n - big_n)
    bandwidth = bandwidth / (float(kernel_mul) ** (kernel_num // 2))
    # Pre-folded per-bandwidth scalars: -1 / (bandwidth * kernel_mul**i)
    neg_inv_bw = (-1.0 / (bandwidth
                          * (float(kernel_mul)
                             ** jnp.arange(kernel_num, dtype=jnp.float32))
                          )).astype(jnp.float32)

    # ---- tiling / padding ----------------------------------------------------
    if big_n <= 512:
        tile = max(8, _round_up(big_n, 8))
    else:
        tile = 512
    n_pad = _round_up(big_n, tile)
    num_tiles = n_pad // tile
    pad = n_pad - big_n

    in_dtype = jnp.promote_types(source.dtype, target.dtype)
    total = jnp.concatenate([source.astype(in_dtype), target.astype(in_dtype)], axis=0)
    total = jnp.pad(total, ((0, pad), (0, 0)))                       # (n_pad, d)

    sqn = jnp.pad(jnp.concatenate([sq_s, sq_t]), (0, pad))           # (n_pad,)
    u = jnp.concatenate([jnp.full((n,), 1.0 / n, jnp.float32),
                         jnp.full((m,), -1.0 / m, jnp.float32)])
    u = jnp.pad(u, (0, pad))                                         # zeros -> no contribution

    sq_row = sqn.reshape(n_pad, 1)
    sq_col = sqn.reshape(1, n_pad)
    u_row = u.reshape(n_pad, 1)
    u_col = u.reshape(1, n_pad)

    # ---- pallas call ----------------------------------------------------------
    kern = functools.partial(_rbf_tile_kernel,
                             kernel_mul=float(kernel_mul),
                             kernel_num=int(kernel_num),
                             matmul_dtype=matmul_dtype)

    itemsize = jnp.dtype(in_dtype).itemsize
    vmem_est = (2 * 2 * tile * d * itemsize        # row+col slabs, double-buffered
                + 8 * tile * tile * 4              # l2 / exp / acc temporaries headroom
                + 8 * tile * 4                     # norm / weight vectors
                + (1 << 20))
    vmem_limit = int(min(max(vmem_est, 32 << 20), 64 << 20))

    n_exps = 1 if float(kernel_mul) == 2.0 else int(kernel_num)
    cost = pl.CostEstimate(
        flops=2 * n_pad * n_pad * d + (6 + 2 * kernel_num) * n_pad * n_pad,
        transcendentals=n_exps * n_pad * n_pad,
        bytes_accessed=(num_tiles + 1) * n_pad * d * itemsize + 4 * n_pad * 4,
    )

    out = pl.pallas_call(
        kern,
        out_shape=jax.ShapeDtypeStruct((1, 128 * num_tiles), jnp.float32),
        grid=(num_tiles, num_tiles),
        in_specs=[
            pl.BlockSpec(memory_space=pltpu.MemorySpace.SMEM),        # neg_inv_bw (kernel_num,)
            pl.BlockSpec((tile, d), lambda i, j: (i, 0)),             # row slab of total
            pl.BlockSpec((tile, d), lambda i, j: (j, 0)),             # col slab of total
            pl.BlockSpec((tile, 1), lambda i, j: (i, 0)),             # row squared norms
            pl.BlockSpec((1, tile), lambda i, j: (0, j)),             # col squared norms
            pl.BlockSpec((tile, 1), lambda i, j: (i, 0)),             # row weights u
            pl.BlockSpec((1, tile), lambda i, j: (0, j)),             # col weights u
        ],
        out_specs=pl.BlockSpec((1, 128), lambda i, j: (0, i)),        # per-row-tile partial
        compiler_params=pltpu.CompilerParams(
            dimension_semantics=("parallel", "arbitrary"),
            vmem_limit_bytes=vmem_limit),
        cost_estimate=cost,
    )(neg_inv_bw, total, total, sq_row, sq_col, u_row, u_col)

    partials = out.reshape(num_tiles, 128)[:, 0]     # all 128 lanes hold the same value
    return jnp.sum(partials)


# -----------------------------------------------------------------------------
# Public wrapper (mirrors MMDLoss.forward)
# -----------------------------------------------------------------------------
def mmd_loss(source, target, kernel_type="linear", kernel_mul=2.0, kernel_num=5,
             fix_sigma=None, matmul_dtype=jnp.float32):
    # NB: the PyTorch module sets self.fix_sigma = None in __init__ regardless of the
    # constructor argument, so fix_sigma is accepted here but ignored (faithful).
    del fix_sigma
    source = jnp.asarray(source)
    target = jnp.asarray(target)
    if kernel_type == "linear":
        return _linear_mmd(source, target)
    elif kernel_type == "rbf":
        return _rbf_mmd(source, target, kernel_mul, kernel_num, matmul_dtype)
    raise ValueError(f"unsupported kernel_type: {kernel_type}")


# -----------------------------------------------------------------------------
# Pure-JAX reference (mirrors the PyTorch code) for correctness checks
# -----------------------------------------------------------------------------
def _mmd_reference(source, target, kernel_type, kernel_mul=2.0, kernel_num=5):
    source = source.astype(jnp.float32)
    target = target.astype(jnp.float32)
    if kernel_type == "linear":
        delta = source.mean(0) - target.mean(0)
        return jnp.dot(delta, delta)
    total = jnp.concatenate([source, target], axis=0)
    diff = total[None, :, :] - total[:, None, :]
    l2 = jnp.sum(diff * diff, axis=2)
    big_n = total.shape[0]
    bandwidth = jnp.sum(l2) / (big_n * big_n - big_n)
    bandwidth = bandwidth / (kernel_mul ** (kernel_num // 2))
    kernels = sum(jnp.exp(-l2 / (bandwidth * kernel_mul ** i))
                  for i in range(kernel_num))
    b = source.shape[0]
    xx = jnp.mean(kernels[:b, :b])
    yy = jnp.mean(kernels[b:, b:])
    xy = jnp.mean(kernels[:b, b:])
    yx = jnp.mean(kernels[b:, :b])
    return xx + yy - xy - yx


# -----------------------------------------------------------------------------
if __name__ == "__main__":
    key = jax.random.PRNGKey(0)
    k1, k2, k3, k4 = jax.random.split(key, 4)

    # Small shapes consistent with the module: source (n, feat), target (m, feat)
    n, m, d = 16, 12, 32
    source = jax.random.normal(k1, (n, d), jnp.float32)
    target = jax.random.normal(k2, (m, d), jnp.float32) + 0.5

    loss_lin = mmd_loss(source, target, kernel_type="linear")
    loss_rbf = mmd_loss(source, target, kernel_type="rbf", kernel_mul=2.0, kernel_num=5)
    loss_rbf_bf16 = mmd_loss(source, target, kernel_type="rbf", kernel_mul=2.0,
                             kernel_num=5, matmul_dtype=jnp.bfloat16)
    loss_lin, loss_rbf, loss_rbf_bf16 = jax.block_until_ready(
        (loss_lin, loss_rbf, loss_rbf_bf16))

    ref_lin = _mmd_reference(source, target, "linear")
    ref_rbf = _mmd_reference(source, target, "rbf", 2.0, 5)

    assert loss_lin.shape == () and loss_rbf.shape == ()
    assert bool(jnp.isfinite(loss_lin)) and bool(jnp.isfinite(loss_rbf))
    assert bool(jnp.allclose(loss_lin, ref_lin, rtol=1e-3, atol=1e-4)), (loss_lin, ref_lin)
    assert bool(jnp.allclose(loss_rbf, ref_rbf, rtol=1e-3, atol=1e-4)), (loss_rbf, ref_rbf)
    # bf16 MXU path: validate it runs and stays sane (looser accuracy by construction).
    assert bool(jnp.isfinite(loss_rbf_bf16))

    # Exercise the multi-tile path (N = n2 + m2 > 512 -> 512-wide tiles, 2x2 grid).
    n2, m2, d2 = 288, 272, 48
    src2 = jax.random.normal(k3, (n2, d2), jnp.float32)
    tgt2 = jax.random.normal(k4, (m2, d2), jnp.float32) * 1.1 + 0.3
    loss2 = jax.block_until_ready(mmd_loss(src2, tgt2, kernel_type="rbf"))
    ref2 = _mmd_reference(src2, tgt2, "rbf", 2.0, 5)
    assert bool(jnp.allclose(loss2, ref2, rtol=1e-3, atol=1e-3)), (loss2, ref2)

    print("KERNEL_OK")
</pallas_src>

<mosaic_0001>
module attributes {stable_mosaic.version = 11 : i64} {
  func.func @_linear_mmd_kernel(%arg0: memref<16x32xf32, #tpu.memory_space<vmem>>, %arg1: memref<12x32xf32, #tpu.memory_space<vmem>>, %arg2: memref<1x1xf32, #tpu.memory_space<vmem>>) attributes {dimension_semantics = [], scalar_prefetch = 0 : i64, scratch_operands = 0 : i64, tpu.core_type = #tpu.core_type<tc>} {
    %c0 = arith.constant 0 : index
    %c0_0 = arith.constant 0 : index
    %0 = vector.load %arg0[%c0, %c0_0] : memref<16x32xf32, #tpu.memory_space<vmem>>, vector<16x32xf32>
    %c0_1 = arith.constant 0 : index
    %c0_2 = arith.constant 0 : index
    %1 = vector.load %arg1[%c0_1, %c0_2] : memref<12x32xf32, #tpu.memory_space<vmem>>, vector<12x32xf32>
    %cst = arith.constant dense<0.000000e+00> : vector<32xf32>
    %2 = vector.multi_reduction <add>, %0, %cst [0] : vector<16x32xf32> to vector<32xf32>
    %3 = vector.shape_cast %2 : vector<32xf32> to vector<1x32xf32>
    %cst_3 = arith.constant 6.250000e-02 : f32
    %4 = vector.broadcast %cst_3 : f32 to vector<1x32xf32>
    %5 = arith.mulf %3, %4 : vector<1x32xf32>
    %cst_4 = arith.constant dense<0.000000e+00> : vector<32xf32>
    %6 = vector.multi_reduction <add>, %1, %cst_4 [0] : vector<12x32xf32> to vector<32xf32>
    %7 = vector.shape_cast %6 : vector<32xf32> to vector<1x32xf32>
    %cst_5 = arith.constant 0.0833333358 : f32
    %8 = vector.broadcast %cst_5 : f32 to vector<1x32xf32>
    %9 = arith.mulf %7, %8 : vector<1x32xf32>
    %10 = arith.subf %5, %9 : vector<1x32xf32>
    %11 = arith.mulf %10, %10 : vector<1x32xf32>
    %12 = vector.shape_cast %11 : vector<1x32xf32> to vector<1x1x32xf32>
    %cst_6 = arith.constant dense<0.000000e+00> : vector<1xf32>
    %13 = vector.multi_reduction <add>, %12, %cst_6 [1, 2] : vector<1x1x32xf32> to vector<1xf32>
    %14 = vector.shape_cast %13 : vector<1xf32> to vector<1x1x1xf32>
    %15 = vector.extract %14[0, 0, 0] : f32 from vector<1x1x1xf32>
    %16 = vector.broadcast %15 : f32 to vector<1x1xf32>
    %c0_7 = arith.constant 0 : index
    %c0_8 = arith.constant 0 : index
    %17 = vector.load %arg2[%c0_7, %c0_8] : memref<1x1xf32, #tpu.memory_space<vmem>>, vector<1x1xf32>
    tpu.vector_store %arg2[%c0_7, %c0_8], %16 {strides = array<i32>} : memref<1x1xf32, #tpu.memory_space<vmem>>, vector<1x1xf32>,
    return
  }
}

</mosaic_0001>

<llo_original>
// kernel: tpu_custom_call.1
$region0: #{tpu_custom_call.1}
  #allocation0 [shape = 'u32[]', space=smem, size = 0x4, offset = 0x4, fixed_abs, tag = 'smem constant byte address 0x4 - core index']
  #allocation1 [shape = 'u32[144,128]{1,0:T(1,128)}', space=vmem, size = 0x12000, scoped, tag = 'internal scratch']
  %s0 = inlined_call_operand.hbm [shape: f32[16,32], index: 0, kind: input, shape index: {}]
  %s1 = inlined_call_operand.hbm [shape: f32[12,32], index: 1, kind: input, shape index: {}]
  %s2 = inlined_call_operand.hbm [shape: f32[1,1], index: 2, kind: output, shape index: {}]
  %s3 = sld [smem:[#allocation0]]
  $region26: #{tpu_custom_call.1} parent=0
    _
  %s5 = ssub.s32 1, %s3
  %s6 = scalar_select 0, %s5, %s3
  $region1: #{tpu_custom_call.1} parent=0
    #allocation2 [shape = 'u8[8192]{0}', space=vmem, size = 0x2000, scoped, tag = 'input window, operand 0, single buffered']
    #allocation3 [shape = 's32[1]{0}', space=sflag, size = 0x4, scoped, tag = 'scoped memory for tpu_custom_call.1']
    #allocation4 [shape = 's32[1]{0}', space=sflag, size = 0x4, scoped, tag = 'scoped memory for tpu_custom_call.1']
    #allocation5 [shape = 'u8[8192]{0}', space=vmem, size = 0x2000, scoped, tag = 'input window, operand 1, single buffered']
    #allocation6 [shape = 's32[1]{0}', space=sflag, size = 0x4, scoped, tag = 'scoped memory for tpu_custom_call.1']
    #allocation7 [shape = 'u8[512]{0}', space=vmem, size = 0x400, scoped, tag = 'output window, operand 0, single buffered']
    %7 = vsyncpa [#allocation3], 0
    %8 = vsyncpa [#allocation6], 0
    %9 = vsyncpa [#allocation4], 0
    // Predicated region
    $region2: #{tpu_custom_call.1} parent=1 // pred_check
      _
    $region3: #{tpu_custom_call.1} parent=1 // pred_check_branch
      %11 = sbr.rel (0) target = $region5
    $region4: #{tpu_custom_call.1} parent=1 // pred_region
      %s13 = ssub.s32 256, 256
      %14 = vsyncadd [#allocation3], %s13
      %s15 = sshll.u32 [#allocation2], 4
      %s16 = int_to_ptr.vmem [resolvable:$true] %s15
      %21 = dma.hbm_to_vmem [thread:$0]  %s0, 256, %s16, [#allocation3], 128, 128, 8
    $region5: #{tpu_custom_call.1} parent=1 // pred_fallthru
      _
    // Predicated region
    $region6: #{tpu_custom_call.1} parent=1 // pred_check
      _
    $region7: #{tpu_custom_call.1} parent=1 // pred_check_branch
      %23 = sbr.rel (0) target = $region9
    $region8: #{tpu_custom_call.1} parent=1 // pred_region
      %s25 = ssub.s32 256, 256
      %26 = vsyncadd [#allocation6], %s25
      %s27 = sshll.u32 [#allocation5], 4
      %s28 = int_to_ptr.vmem [resolvable:$true] %s27
      %33 = dma.hbm_to_vmem [thread:$0]  %s1, 256, %s28, [#allocation6], 128, 128, 8
    $region9: #{tpu_custom_call.1} parent=1 // pred_fallthru
      _
    // Predicated region
    $region10: #{tpu_custom_call.1} parent=1 // pred_check
      _
    $region11: #{tpu_custom_call.1} parent=1 // pred_check_branch
      %35 = sbr.rel (0) target = $region13
    $region12: #{tpu_custom_call.1} parent=1 // pred_region
      %36 = dma.done [#allocation3], 256
    $region13: #{tpu_custom_call.1} parent=1 // pred_fallthru
      _
    // Predicated region
    $region14: #{tpu_custom_call.1} parent=1 // pred_check
      _
    $region15: #{tpu_custom_call.1} parent=1 // pred_check_branch
      %38 = sbr.rel (0) target = $region17
    $region16: #{tpu_custom_call.1} parent=1 // pred_region
      %39 = dma.done [#allocation6], 256
    $region17: #{tpu_custom_call.1} parent=1 // pred_fallthru
      _
    %v40 = vld [vmem:[#allocation2] sm:$0xff]
    %v41 = vld [vmem:[#allocation2 + $0x8] sm:$0xff]
    %v42 = vld [vmem:[#allocation5] sm:$0xff]
    %v43 = vld [vmem:[#allocation5 + $0x8] sm:$0xf]
    %vm44 = vcmask 261120
    %v45 = vsel %vm44, %v40, 0.0
    %v46 = vsel %vm44, %v41, 0.0
    %v47 = vadd.f32 %v45, %v46
    %v48 = vrot.slane %v47, 4
    %v49 = vadd.f32 %v47, %v48
    %v50 = vrot.slane %v49, 2
    %v51 = vadd.f32 %v49, %v50
    %v52 = vrot.slane %v51, 1
    %v53 = vadd.f32 %v51, %v52
    %v54 = vmul.f32 %v53, 0.0625
    %v55 = vsel %vm44, %v42, 0.0
    %vm56 = vcmask 257024
    %v57 = vsel %vm56, %v43, 0.0
    %v58 = vadd.f32 %v55, %v57
    %v59 = vrot.slane %v58, 4
    %v60 = vadd.f32 %v58, %v59
    %v61 = vrot.slane %v60, 2
    %v62 = vadd.f32 %v60, %v61
    %v63 = vrot.slane %v62, 1
    %v64 = vadd.f32 %v62, %v63
    %v65 = vmul.f32 %v64, 0.083333336
    %v66 = vsub.f32 %v54, %v65
    %v67 = vmul.f32 %v66, %v66
    %vm68 = vcmask 253952
    %v69 = vsel %vm68, %v67, 0.0
    %70 = vadd.xlane.f32.xlu0 %v69
    %v71 = vpop.xlane.xlu0 %70
    %v72 = vrot.slane %v71, 4
    %v73 = vadd.f32 %v71, %v72
    %v74 = vrot.slane %v73, 2
    %v75 = vadd.f32 %v73, %v74
    %v76 = vrot.slane %v75, 1
    %v77 = vadd.f32 %v75, %v76
    %s78 = vtos %v77
    %v79 = vstv %s78
    %vm80 = vcmask 0
    %81 = vst.msk [vmem:[#allocation7] sm:$0x1] %vm80, %v79
    // Predicated region
    $region18: #{tpu_custom_call.1} parent=1 // pred_check
      _
    $region19: #{tpu_custom_call.1} parent=1 // pred_check_branch
      %83 = sbr.rel (0) target = $region21
    $region20: #{tpu_custom_call.1} parent=1 // pred_region
      %s85 = ssub.s32 16, 16
      %86 = vsyncadd [#allocation4], %s85
      %s88 = sshll.u32 [#allocation7], 4
      %s89 = int_to_ptr.vmem [resolvable:$true] %s88
      %91 = dma.vmem_to_hbm [thread:$0]  %s89, 16, %s2, [#allocation4]
    $region21: #{tpu_custom_call.1} parent=1 // pred_fallthru
      _
    // Predicated region
    $region22: #{tpu_custom_call.1} parent=1 // pred_check
      _
    $region23: #{tpu_custom_call.1} parent=1 // pred_check_branch
      %93 = sbr.rel (0) target = $region25
    $region24: #{tpu_custom_call.1} parent=1 // pred_region
      %94 = dma.done [#allocation4], 16
    $region25: #{tpu_custom_call.1} parent=1 // pred_fallthru
      _
    %95 = vsyncpa [#allocation3], 1
    %96 = vsyncpa [#allocation6], 1
    %97 = vsyncpa [#allocation4], 1

</llo_original>
